<compile_context>
chip_gen: v7x
topology: tpu7x:2x2x1
jax: 0.10.0
libtpu: 0.0.40
codegen_flags: <defaults>
</compile_context>

<pallas_src>
import math
import functools

import jax
import jax.numpy as jnp
from jax import lax
from jax.experimental import pallas as pl
from jax.experimental.pallas import tpu as pltpu


def _attention_kernel(x_ref, wqkv_ref, o_ref, *, attn_dim, use_bf16):
    # x_ref   : (Bb, T, E)   batch tile of the input
    # wqkv_ref: (E, 3A)      fused [Wk^T | Wq^T | Wv^T] (constant block -> resident)
    # o_ref   : (Bb*T, A)    output rows for this batch tile
    Bb, T, E = x_ref.shape
    A = attn_dim

    x2 = x_ref[...].reshape(Bb * T, E)   # merges leading dims only: no lane repack
    w = wqkv_ref[...]
    if use_bf16:
        x2 = x2.astype(jnp.bfloat16)
        w = w.astype(jnp.bfloat16)

    # One fused projection matmul instead of three.
    kqv = jnp.dot(x2, w, preferred_element_type=jnp.float32)          # (Bb*T, 3A)

    k = kqv[:, 0 * A:1 * A].reshape(Bb, T, A)
    # Fold the 1/sqrt(A) scale into q (T*A elements instead of T*T scores).
    q = kqv[:, 1 * A:2 * A].reshape(Bb, T, A) * (1.0 / math.sqrt(attn_dim))
    v = kqv[:, 2 * A:3 * A].reshape(Bb, T, A)

    # scores[b,t,s] = sum_d q[b,t,d] * k[b,s,d]: contract the LAST dim of both
    # operands so k^T is never materialized through the XLU.
    scores = jnp.einsum('btd,bsd->bts', q, k,
                        preferred_element_type=jnp.float32)           # (Bb, T, T)

    # Causal (lower-triangular) mask from a single (T,1) vs (1,T) comparison.
    row = lax.broadcasted_iota(jnp.int32, (T, 1), 0)
    col = lax.broadcasted_iota(jnp.int32, (1, T), 1)
    scores = jnp.where(col <= row, scores, -jnp.inf)

    # Numerically stable softmax along the last axis.
    m = jnp.max(scores, axis=-1, keepdims=True)
    p = jnp.exp(scores - m)
    denom = jnp.sum(p, axis=-1, keepdims=True)
    inv = pl.reciprocal(denom, approx=True)   # EUP slot (free vs. VALU divide)
    inv = inv * (2.0 - denom * inv)           # one Newton step -> f32 accuracy
    weights = p * inv

    if use_bf16:
        weights = weights.astype(jnp.bfloat16)
        v = v.astype(jnp.bfloat16)
    out = jnp.einsum('bts,bsa->bta', weights, v,
                     preferred_element_type=jnp.float32)              # (Bb, T, A)

    # Exact torch formula: round(out * 10000) / 10000 (round-half-to-even).
    out = jnp.round(out * 10000.0) / 10000.0

    o_ref[...] = out.reshape(Bb * T, A)


_VMEM_TILE_BUDGET_BYTES = 24 * 1024 * 1024  # headroom under the 32 MiB scoped limit


def _vmem_bytes_per_batch_row(T, E, A):
    # f32 VMEM footprint contributed by one batch row of the tile:
    #   2*T*E : x block, double-buffered by the BlockSpec pipeline
    #   3*T*T : scores / exp(p) / weights temporaries live simultaneously
    #   9*T*A : fused kqv output + sliced q/k/v + pre-store out + output buffers
    return 4 * (2 * T * E + 3 * T * T + 9 * T * A)


def _fixed_vmem_bytes(E, A):
    return 2 * 4 * E * 3 * A   # resident fused (E, 3A) weight (two buffers)


def _pick_batch_block(B, T, E, A):
    per_b = _vmem_bytes_per_batch_row(T, E, A)
    avail = max(_VMEM_TILE_BUDGET_BYTES - _fixed_vmem_bytes(E, A), per_b)
    max_bb = max(1, avail // per_b)
    if B >= 2:
        # >= 2 grid steps so the "parallel" batch axis can shard across the two
        # v7x TensorCores (no effect on single-TC v5e/v6e).
        max_bb = min(max_bb, B // 2)
    max_bb = int(min(max_bb, B))
    # Largest divisor of B that fits AND keeps the output block legal: the output
    # slab is (block_b*T, A) over (B*T, A), so block_b*T must be a multiple of 8
    # (sublane tile) unless the block spans the whole batch.
    best = None
    for d in range(1, max_bb + 1):
        if B % d == 0 and ((d * T) % 8 == 0 or d == B):
            best = d
    if best is None:
        best = B   # single full-extent block: always legal
    return best


def single_head_attention(embedded, w_key, w_query, w_value, *,
                          block_b=None, use_bf16_matmul=False):
    """embedded: (B, T, E) float32. w_*: (A, E) float32 (PyTorch (out, in) layout).

    Returns (B, T, A) float32, matching SingleHeadAttention.forward.
    """
    B, T, E = embedded.shape
    A = w_key.shape[0]

    # Pre-transpose + fuse the three projection weights ONCE in XLA, outside the grid.
    w_qkv = jnp.concatenate(
        [jnp.asarray(w_key, jnp.float32).T,     # (E, A)
         jnp.asarray(w_query, jnp.float32).T,
         jnp.asarray(w_value, jnp.float32).T],
        axis=1)                                 # (E, 3A), column order [K | Q | V]

    if block_b is None:
        block_b = _pick_batch_block(B, T, E, A)
    grid_b = B // block_b

    # Explicit VMEM limit: raises v5e's 16 MiB default, stays within v7x's 64 MiB.
    needed = _fixed_vmem_bytes(E, A) + _vmem_bytes_per_batch_row(T, E, A) * block_b
    vmem_limit = int(min(128 * 1024 * 1024,
                         max(32 * 1024 * 1024, int(needed * 1.25))))

    kernel = functools.partial(_attention_kernel, attn_dim=A, use_bf16=use_bf16_matmul)

    out2d = pl.pallas_call(
        kernel,
        out_shape=jax.ShapeDtypeStruct((B * T, A), jnp.float32),
        grid_spec=pltpu.PrefetchScalarGridSpec(
            num_scalar_prefetch=0,
            grid=(grid_b,),
            in_specs=[
                pl.BlockSpec((block_b, T, E), lambda b: (b, 0, 0)),   # batch tile of x
                pl.BlockSpec((E, 3 * A), lambda b: (0, 0)),           # fused W (resident)
            ],
            out_specs=pl.BlockSpec((block_b * T, A), lambda b: (b, 0)),
        ),
        compiler_params=pltpu.CompilerParams(
            dimension_semantics=("parallel",),   # batch-tile axis -> megacore on v7x
            vmem_limit_bytes=vmem_limit,
        ),
    )(jnp.asarray(embedded, jnp.float32), w_qkv)

    # TODO(synk): for T >= ~1024 add a KV-tile "arbitrary" grid axis with online-softmax
    # (flash) VMEM accumulators and causal-tile skipping so the (Bb, T, T) score block
    # never materializes (mandatory on v7x's 64 MiB VMEM).
    return out2d.reshape(B, T, A)


if __name__ == "__main__":
    # Small shapes consistent with the module's forward.
    B, T, E, A = 2, 8, 32, 16

    key = jax.random.PRNGKey(0)
    kx, kk, kq, kv = jax.random.split(key, 4)

    # nn.Linear-style uniform(-1/sqrt(E), 1/sqrt(E)); weight shape (out, in) = (A, E).
    bound = 1.0 / math.sqrt(E)
    w_key = jax.random.uniform(kk, (A, E), jnp.float32, -bound, bound)
    w_query = jax.random.uniform(kq, (A, E), jnp.float32, -bound, bound)
    w_value = jax.random.uniform(kv, (A, E), jnp.float32, -bound, bound)

    embedded = jax.random.normal(kx, (B, T, E), jnp.float32)

    out = single_head_attention(embedded, w_key, w_query, w_value)
    out = jax.block_until_ready(out)

    # Pure-JAX reference (mirrors the PyTorch forward).
    k = embedded @ w_key.T
    q = embedded @ w_query.T
    v = embedded @ w_value.T
    scores = (q @ jnp.swapaxes(k, 1, 2)) / math.sqrt(A)
    mask = jnp.tril(jnp.ones((T, T)))
    scores = jnp.where(mask == 0, -jnp.inf, scores)
    weights = jax.nn.softmax(scores, axis=-1)
    ref = jnp.round((weights @ v) * 10000.0) / 10000.0

    assert out.shape == (B, T, A)
    assert jnp.allclose(out, ref, atol=1e-4), "mismatch vs reference"

    print("KERNEL_OK")
</pallas_src>

<mosaic_0001>
module attributes {stable_mosaic.version = 11 : i64} {
  func.func @_attention_kernel(%arg0: i32, %arg1: memref<1x8x32xf32, #tpu.memory_space<vmem>>, %arg2: memref<32x48xf32, #tpu.memory_space<vmem>>, %arg3: memref<8x16xf32, #tpu.memory_space<vmem>>) attributes {dimension_semantics = [#tpu.dimension_semantics<parallel>], iteration_bounds = array<i64: 2>, scalar_prefetch = 0 : i64, scratch_operands = 0 : i64, tpu.core_type = #tpu.core_type<tc>, window_params = [{transform_indices = @transform_0, window_bounds = array<i64: 1, 8, 32>}, {pipeline_mode = #tpu.pipeline_mode<synchronous>, transform_indices = @transform_1, window_bounds = array<i64: 32, 48>}, {transform_indices = @transform_2, window_bounds = array<i64: 8, 16>}]} {
    %c0 = arith.constant 0 : index
    %c0_0 = arith.constant 0 : index
    %c0_1 = arith.constant 0 : index
    %0 = vector.load %arg1[%c0, %c0_0, %c0_1] : memref<1x8x32xf32, #tpu.memory_space<vmem>>, vector<1x8x32xf32>
    %1 = vector.shape_cast %0 : vector<1x8x32xf32> to vector<8x32xf32>
    %c0_2 = arith.constant 0 : index
    %c0_3 = arith.constant 0 : index
    %2 = vector.load %arg2[%c0_2, %c0_3] : memref<32x48xf32, #tpu.memory_space<vmem>>, vector<32x48xf32>
    %cst = arith.constant dense<0.000000e+00> : vector<8x48xf32>
    %3 = tpu.matmul %1, %2, %cst {dimension_numbers = #tpu.dot_dimension_numbers<[1], [0], [0], [1], [0, 0, 1, 1], [], []>} : vector<8x32xf32>, vector<32x48xf32>, vector<8x48xf32> -> vector<8x48xf32>
    %4 = vector.extract_strided_slice %3 {offsets = [0, 0], sizes = [8, 16], strides = [1, 1]} : vector<8x48xf32> to vector<8x16xf32>
    %5 = vector.shape_cast %4 : vector<8x16xf32> to vector<1x8x16xf32>
    %6 = vector.extract_strided_slice %3 {offsets = [0, 16], sizes = [8, 16], strides = [1, 1]} : vector<8x48xf32> to vector<8x16xf32>
    %7 = vector.shape_cast %6 : vector<8x16xf32> to vector<1x8x16xf32>
    %cst_4 = arith.constant 2.500000e-01 : f32
    %8 = vector.broadcast %cst_4 : f32 to vector<1x8x16xf32>
    %9 = arith.mulf %7, %8 : vector<1x8x16xf32>
    %10 = vector.extract_strided_slice %3 {offsets = [0, 32], sizes = [8, 16], strides = [1, 1]} : vector<8x48xf32> to vector<8x16xf32>
    %11 = vector.shape_cast %10 : vector<8x16xf32> to vector<1x8x16xf32>
    "tpu.trace_start"() <{level = 10 : i32, message = "btd,bsd->bts"}> : () -> ()
    %cst_5 = arith.constant dense<0.000000e+00> : vector<1x8x8xf32>
    %12 = tpu.matmul %9, %5, %cst_5 {dimension_numbers = #tpu.dot_dimension_numbers<[2], [2], [1], [1], [0, 0, 0, 1, 1, 1], [0], [0]>} : vector<1x8x16xf32>, vector<1x8x16xf32>, vector<1x8x8xf32> -> vector<1x8x8xf32>
    "tpu.trace_stop"() : () -> ()
    %13 = tpu.iota {dimensions = array<i32: 0>} : vector<8x1xi32>
    %14 = tpu.iota {dimensions = array<i32: 1>} : vector<1x8xi32>
    %15 = vector.broadcast %14 : vector<1x8xi32> to vector<8x8xi32>
    %16 = vector.broadcast %13 : vector<8x1xi32> to vector<8x8xi32>
    %17 = arith.cmpi sle, %15, %16 : vector<8x8xi32>
    %cst_6 = arith.constant 0xFF800000 : f32
    %18 = vector.shape_cast %17 : vector<8x8xi1> to vector<1x8x8xi1>
    %19 = vector.broadcast %cst_6 : f32 to vector<1x8x8xf32>
    %20 = arith.select %18, %12, %19 : vector<1x8x8xi1>, vector<1x8x8xf32>
    %cst_7 = arith.constant dense<0xFF800000> : vector<1x8xf32>
    %21 = vector.multi_reduction <maximumf>, %20, %cst_7 [2] : vector<1x8x8xf32> to vector<1x8xf32>
    %22 = vector.shape_cast %21 : vector<1x8xf32> to vector<1x8x1xf32>
    %23 = vector.broadcast %22 : vector<1x8x1xf32> to vector<1x8x8xf32>
    %24 = arith.subf %20, %23 : vector<1x8x8xf32>
    %25 = math.exp %24 : vector<1x8x8xf32>
    %cst_8 = arith.constant dense<0.000000e+00> : vector<1x8xf32>
    %26 = vector.multi_reduction <add>, %25, %cst_8 [2] : vector<1x8x8xf32> to vector<1x8xf32>
    %27 = vector.shape_cast %26 : vector<1x8xf32> to vector<1x8x1xf32>
    %28 = tpu.reciprocal %27 {approx = true} : vector<1x8x1xf32> -> vector<1x8x1xf32>
    %29 = arith.mulf %27, %28 : vector<1x8x1xf32>
    %cst_9 = arith.constant 2.000000e+00 : f32
    %30 = vector.broadcast %cst_9 : f32 to vector<1x8x1xf32>
    %31 = arith.subf %30, %29 : vector<1x8x1xf32>
    %32 = arith.mulf %28, %31 : vector<1x8x1xf32>
    %33 = vector.broadcast %32 : vector<1x8x1xf32> to vector<1x8x8xf32>
    %34 = arith.mulf %25, %33 : vector<1x8x8xf32>
    "tpu.trace_start"() <{level = 10 : i32, message = "bts,bsa->bta"}> : () -> ()
    %cst_10 = arith.constant dense<0.000000e+00> : vector<1x8x16xf32>
    %35 = tpu.matmul %34, %11, %cst_10 {dimension_numbers = #tpu.dot_dimension_numbers<[2], [1], [1], [2], [0, 0, 0, 1, 1, 2], [0], [0]>} : vector<1x8x8xf32>, vector<1x8x16xf32>, vector<1x8x16xf32> -> vector<1x8x16xf32>
    "tpu.trace_stop"() : () -> ()
    %cst_11 = arith.constant 1.000000e+04 : f32
    %36 = vector.broadcast %cst_11 : f32 to vector<1x8x16xf32>
    %37 = arith.mulf %35, %36 : vector<1x8x16xf32>
    %38 = math.roundeven %37 : vector<1x8x16xf32>
    %cst_12 = arith.constant 1.000000e+04 : f32
    %39 = vector.broadcast %cst_12 : f32 to vector<1x8x16xf32>
    %40 = arith.divf %38, %39 : vector<1x8x16xf32>
    %41 = vector.shape_cast %40 : vector<1x8x16xf32> to vector<8x16xf32>
    %c0_13 = arith.constant 0 : index
    %c0_14 = arith.constant 0 : index
    %42 = vector.load %arg3[%c0_13, %c0_14] : memref<8x16xf32, #tpu.memory_space<vmem>>, vector<8x16xf32>
    tpu.vector_store %arg3[%c0_13, %c0_14], %41 {strides = array<i32>} : memref<8x16xf32, #tpu.memory_space<vmem>>, vector<8x16xf32>,
    return
  }
  func.func @transform_0(%arg0: i32) -> (i32, i32, i32) {
    %c0_i32 = arith.constant 0 : i32
    %c0_i32_0 = arith.constant 0 : i32
    %c0_i32_1 = arith.constant 0 : i32
    return %arg0, %c0_i32, %c0_i32_0 : i32, i32, i32
  }
  func.func @transform_1(%arg0: i32) -> (i32, i32) {
    %c0_i32 = arith.constant 0 : i32
    %c0_i32_0 = arith.constant 0 : i32
    %c0_i32_1 = arith.constant 0 : i32
    return %c0_i32, %c0_i32_0 : i32, i32
  }
  func.func @transform_2(%arg0: i32) -> (i32, i32) {
    %c0_i32 = arith.constant 0 : i32
    %c0_i32_0 = arith.constant 0 : i32
    return %arg0, %c0_i32 : i32, i32
  }
}

</mosaic_0001>

<llo_original>
// kernel: tpu_custom_call.1
$region0: #{tpu_custom_call.1}
  #allocation0 [shape = 'u32[]', space=smem, size = 0x4, offset = 0x4, fixed_abs, tag = 'smem constant byte address 0x4 - core index']
  #allocation1 [shape = 'u32[144,128]{1,0:T(1,128)}', space=vmem, size = 0x12000, scoped, tag = 'internal scratch']
  %s0 = inlined_call_operand.hbm [shape: f32[2,8,32], index: 0, kind: input, shape index: {}]
  %s1 = inlined_call_operand.hbm [shape: f32[32,48], index: 1, kind: input, shape index: {}]
  %s2 = inlined_call_operand.hbm [shape: f32[16,16], index: 2, kind: output, shape index: {}]
  %s3 = sld [smem:[#allocation0]]
  $region49: #{tpu_custom_call.1} parent=0
    _
  %s5 = ssub.s32 1, %s3
  %s6 = scalar_select 0, %s5, %s3
  $region1: #{tpu_custom_call.1} parent=0
    #allocation2 [shape = 'u8[8192]{0}', space=vmem, size = 0x2000, scoped, tag = 'input window, operand 0']
    #allocation3 [shape = 's32[2]{0}', space=sflag, size = 0x8, scoped, tag = 'scoped memory for tpu_custom_call.1']
    #allocation4 [shape = 's32[2]{0}', space=sflag, size = 0x8, scoped, tag = 'scoped memory for tpu_custom_call.1']
    #allocation5 [shape = 'u8[16384]{0}', space=vmem, size = 0x4000, scoped, tag = 'input window, operand 1, single buffered']
    #allocation6 [shape = 's32[1]{0}', space=sflag, size = 0x4, scoped, tag = 'scoped memory for tpu_custom_call.1']
    #allocation7 [shape = 'u8[8192]{0}', space=vmem, size = 0x2000, scoped, tag = 'output window, operand 0']
    %7 = vsyncpa [#allocation3], 0
    %s8 = scalar_lea.sflag [#allocation3], 1
    %9 = vsyncpa %s8, 0
    %10 = vsyncpa [#allocation6], 0
    %11 = vsyncpa [#allocation4], 0
    %s12 = scalar_lea.sflag [#allocation4], 1
    %13 = vsyncpa %s12, 0
    loop: start=0, step=1, limit=4
    $region2: #{tpu_custom_call.1} parent=1 // loop_pre_header
      _
    $region3: #{tpu_custom_call.1} parent=1 // loop_header
      %s15 = sphi 0, %s19
      %p16 = scmp.ge.s32.totalorder %s15, 4
      %s25 = sphi 0, %s27
      %s28 = sphi 0, %s25
      %s29 = sphi 0, %s28
      %s45 = sphi 0, %s29
      %s49 = sphi 0, %s49
      %s51 = sphi 0, %s49
      %s52 = sphi 0, %s51
      %s66 = sphi 0, %s52
      %s72 = sphi 0, %s74
      %s75 = sphi 0, %s72
      %s76 = sphi 0, %s75
      %s92 = sphi 0, %s76
    $region4: #{tpu_custom_call.1} parent=1 // loop_header_branch
      %18 = sbr.rel (%p16) target = $region8
    $region5: #{tpu_custom_call.1} parent=1 // loop_body
      %s20 = ssub.s32 %s15, 1
      %s21 = ssub.s32 %s15, 2
      %s22 = sadd.s32 %s15, 1
      %s23 = ssub.s32 %s15, %s22
      %p24 = scmp.eq.s32.totalorder %s23, 0
      %s26 = sadd.s32 %s25, 1
      %s27 = scalar_select %p24, %s25, %s26
      %p30 = pneg %p24
      %p31 = scmp.eq.s32.totalorder %s15, 1
      %p32 = por %p30, %p31
      %p33 = scmp.ne.s32.totalorder %s25, %s28
      %p34 = scmp.eq.s32.totalorder %s15, 0
      %p35 = por %p33, %p34
      %p36 = scmp.ne.s32.totalorder %s25, %s28
      %p37 = scmp.eq.s32.totalorder %s20, 1
      %p38 = por %p36, %p37
      %p39 = scmp.ne.s32.totalorder %s28, %s29
      %p40 = scmp.eq.s32.totalorder %s20, 0
      %p41 = por %p39, %p40
      %p42 = scmp.ne.s32.totalorder %s28, %s29
      %p43 = scmp.eq.s32.totalorder %s21, 1
      %p44 = por %p42, %p43
      %p46 = scmp.ne.s32.totalorder %s29, %s45
      %p47 = scmp.eq.s32.totalorder %s21, 0
      %p48 = por %p46, %p47
      %s50 = sadd.s32 %s49, 1
      %p53 = scmp.eq.s32.totalorder %s15, 1
      %p54 = scmp.ne.s32.totalorder %s49, %s51
      %p55 = scmp.eq.s32.totalorder %s15, 0
      %p56 = por %p54, %p55
      %p57 = scmp.ne.s32.totalorder %s49, %s51
      %p58 = scmp.eq.s32.totalorder %s20, 1
      %p59 = por %p57, %p58
      %p60 = scmp.ne.s32.totalorder %s51, %s52
      %p61 = scmp.eq.s32.totalorder %s20, 0
      %p62 = por %p60, %p61
      %p63 = scmp.ne.s32.totalorder %s51, %s52
      %p64 = scmp.eq.s32.totalorder %s21, 1
      %p65 = por %p63, %p64
      %p67 = scmp.ne.s32.totalorder %s52, %s66
      %p68 = scmp.eq.s32.totalorder %s21, 0
      %p69 = por %p67, %p68
      %s70 = ssub.s32 %s15, %s22
      %p71 = scmp.eq.s32.totalorder %s70, 0
      %s73 = sadd.s32 %s72, 1
      %s74 = scalar_select %p71, %s72, %s73
      %p77 = pneg %p71
      %p78 = scmp.eq.s32.totalorder %s15, 1
      %p79 = por %p77, %p78
      %p80 = scmp.ne.s32.totalorder %s72, %s75
      %p81 = scmp.eq.s32.totalorder %s15, 0
      %p82 = por %p80, %p81
      %p83 = scmp.ne.s32.totalorder %s72, %s75
      %p84 = scmp.eq.s32.totalorder %s20, 1
      %p85 = por %p83, %p84
      %p86 = scmp.ne.s32.totalorder %s75, %s76
      %p87 = scmp.eq.s32.totalorder %s20, 0
      %p88 = por %p86, %p87
      %p89 = scmp.ne.s32.totalorder %s75, %s76
      %p90 = scmp.eq.s32.totalorder %s21, 1
      %p91 = por %p89, %p90
      %p93 = scmp.ne.s32.totalorder %s76, %s92
      %p94 = scmp.eq.s32.totalorder %s21, 0
      %p95 = por %p93, %p94
      %p96 = scmp.le.s32.totalorder 1, %s15
      %p97 = scmp.lt.s32.totalorder %s15, 3
      %p98 = pnand %p96, %p97
      %p99 = pneg %p98
      // Predicated region
      $region9: #{tpu_custom_call.1} parent=5 // pred_check
        _
      $region10: #{tpu_custom_call.1} parent=5 // pred_check_branch
        %101 = sbr.rel (%p98) target = $region12
      $region11: #{tpu_custom_call.1} parent=5 // pred_region
        %s102 = ssub.s32 %s15, 1
        // Predicated region
        $region13: #{tpu_custom_call.1} parent=11 // pred_check
          %p103 = pneg %p62
        $region14: #{tpu_custom_call.1} parent=11 // pred_check_branch
          %105 = sbr.rel (%p103) target = $region16
        $region15: #{tpu_custom_call.1} parent=11 // pred_region
          %s107 = ssub.s32 512, 512
          %108 = vsyncadd [#allocation6], %s107
          %s109 = sshll.u32 [#allocation5], 4
          %s110 = int_to_ptr.vmem [resolvable:$true] %s109
          %115 = dma.hbm_to_vmem [thread:$0]  %s1, 512, %s110, [#allocation6], 128, 128, 8
        $region16: #{tpu_custom_call.1} parent=11 // pred_fallthru
          _
      $region12: #{tpu_custom_call.1} parent=5 // pred_fallthru
        _
      %p116 = scmp.lt.s32.totalorder %s15, 2
      // Predicated region
      $region17: #{tpu_custom_call.1} parent=5 // pred_check
        %p117 = pneg %p116
      $region18: #{tpu_custom_call.1} parent=5 // pred_check_branch
        %119 = sbr.rel (%p117) target = $region20
      $region19: #{tpu_custom_call.1} parent=5 // pred_region
        // Predicated region
        $region21: #{tpu_custom_call.1} parent=19 // pred_check
          %p120 = pneg %p35
        $region22: #{tpu_custom_call.1} parent=19 // pred_check_branch
          %122 = sbr.rel (%p120) target = $region24
        $region23: #{tpu_custom_call.1} parent=19 // pred_region
          %s123 = sand.u32 %s25, 1
          %s124 = scalar_lea.sflag [#allocation3], %s123
          %s125 = sand.u32 %s25, 1
          %s126 = smul.addr %s125, 8
          %s127 = scalar_lea.vmem [#allocation2], %s126
          %s129 = ssub.s32 128, 128
          %130 = vsyncadd %s124, %s129
          %s131 = smul.addr %s15, 128
          %s132 = scalar_lea.hbm %s0, %s131
          %s134 = sshll.u32 %s127, 4
          %s135 = int_to_ptr.vmem [resolvable:$true] %s134
          %137 = dma.hbm_to_vmem [thread:$0]  %s132, 128, %s135, %s124
        $region24: #{tpu_custom_call.1} parent=19 // pred_fallthru
          _
      $region20: #{tpu_custom_call.1} parent=5 // pred_fallthru
        _
      %p138 = scmp.le.s32.totalorder 1, %s15
      %p139 = scmp.lt.s32.totalorder %s15, 3
      %p140 = pnand %p138, %p139
      %p141 = pneg %p140
      // Predicated region
      $region25: #{tpu_custom_call.1} parent=5 // pred_check
        _
      $region26: #{tpu_custom_call.1} parent=5 // pred_check_branch
        %143 = sbr.rel (%p140) target = $region28
      $region27: #{tpu_custom_call.1} parent=5 // pred_region
        %s144 = ssub.s32 %s15, 1
        %s145 = sand.u32 %s28, 1
        %s146 = scalar_lea.sflag [#allocation3], %s145
        %s147 = sand.u32 %s28, 1
        %s148 = smul.addr %s147, 8
        %s149 = scalar_lea.vmem [#allocation2], %s148
        // Predicated region
        $region29: #{tpu_custom_call.1} parent=27 // pred_check
          %p150 = pneg %p41
        $region30: #{tpu_custom_call.1} parent=27 // pred_check_branch
          %152 = sbr.rel (%p150) target = $region32
        $region31: #{tpu_custom_call.1} parent=27 // pred_region
          %153 = dma.done %s146, 128
        $region32: #{tpu_custom_call.1} parent=27 // pred_fallthru
          _
        // Predicated region
        $region33: #{tpu_custom_call.1} parent=27 // pred_check
          %p154 = pneg %p62
        $region34: #{tpu_custom_call.1} parent=27 // pred_check_branch
          %156 = sbr.rel (%p154) target = $region36
        $region35: #{tpu_custom_call.1} parent=27 // pred_region
          %157 = dma.done [#allocation6], 512
        $region36: #{tpu_custom_call.1} parent=27 // pred_fallthru
          _
        %s158 = sand.u32 %s28, 1
        %s159 = scalar_lea.sflag [#allocation3], %s158
        %s160 = sand.u32 %s28, 1
        %s161 = smul.addr %s160, 8
        %s162 = scalar_lea.vmem [#allocation2], %s161
        %p163 = pneg %p41
        %p164 = pneg %p38
        %p165 = pneg %p62
        %p166 = pneg %p59
        %p167 = pneg %p88
        %p168 = pneg %p85
        %s169 = sand.u32 %s75, 1
        %s170 = scalar_lea.sflag [#allocation4], %s169
        %s171 = sand.u32 %s75, 1
        %s172 = smul.addr %s171, 8
        %s173 = scalar_lea.vmem [#allocation7], %s172
        %v174 = vld [vmem:[%s149] sm:$0xff]
        %v175 = vld [vmem:[#allocation5] sm:$0xff]
        %v176 = vld [vmem:[#allocation5 + $0x8] sm:$0xff]
        %v177 = vld [vmem:[#allocation5 + $0x10] sm:$0xff]
        %v178 = vld [vmem:[#allocation5 + $0x18] sm:$0xff]
        %vm179 = vcmask 261120
        %v181 = vsel %vm179, %v174, 0
        %183 = vmatprep.subr.mxu0 0.0
        %184 = vmatpush1.msra.mxu0 %v175
        %185 = vmatprep.subr.mxu0 0.0
        %186 = vmatpush1.msra.mxu0 %v176
        %187 = vmatprep.subr.mxu0 0.0
        %188 = vmatpush1.msra.mxu0 %v177
        %189 = vmatprep.subr.mxu0 0.0
        %190 = vmatpush1.msra.mxu0 %v178
        %191 = vmatprep.subr.mxu0 0.0
        %192 = vmatpush1.msra.mxu0 0.0
        %193 = vmatprep.subr.mxu0 0.0
        %194 = vmatpush1.msra.mxu0 0.0
        %195 = vmatprep.subr.mxu0 0.0
        %196 = vmatpush1.msra.mxu0 0.0
        %197 = vmatprep.subr.mxu0 0.0
        %198 = vmatpush1.msra.mxu0 0.0
        %199 = vmatprep.subr.mxu0 0.0
        %200 = vmatpush1.msra.mxu0 0.0
        %201 = vmatprep.subr.mxu0 0.0
        %202 = vmatpush1.msra.mxu0 0.0
        %203 = vmatprep.subr.mxu0 0.0
        %204 = vmatpush1.msra.mxu0 0.0
        %205 = vmatprep.subr.mxu0 0.0
        %206 = vmatpush1.msra.mxu0 0.0
        %207 = vmatprep.subr.mxu0 0.0
        %208 = vmatpush1.msra.mxu0 0.0
        %209 = vmatprep.subr.mxu0 0.0
        %210 = vmatpush1.msra.mxu0 0.0
        %211 = vmatprep.subr.mxu0 0.0
        %212 = vmatpush1.msra.mxu0 0.0
        %213 = vmatprep.subr.mxu0 0.0
        %214 = vmatpush1.msra.mxu0 0.0
        %215 = vmatprep.subr.mxu0 0.0
        %216 = vmatpush1.msra.mxu0 0.0
        %217 = vmatprep.subr.mxu0 0.0
        %218 = vmatpush1.msra.mxu0 0.0
        %219 = vmatprep.subr.mxu0 0.0
        %220 = vmatpush1.msra.mxu0 0.0
        %221 = vmatprep.subr.mxu0 0.0
        %222 = vmatpush1.msra.mxu0 0.0
        %223 = vmatprep.subr.mxu0 0.0
        %224 = vmatpush1.msra.mxu0 0.0
        %225 = vmatprep.subr.mxu0 0.0
        %226 = vmatpush1.msra.mxu0 0.0
        %227 = vmatprep.subr.mxu0 0.0
        %228 = vmatpush1.msra.mxu0 0.0
        %229 = vmatprep.subr.mxu0 0.0
        %230 = vmatpush1.msra.mxu0 0.0
        %231 = vmatprep.subr.mxu0 0.0
        %232 = vmatpush1.msra.mxu0 0.0
        %233 = vmatprep.subr.mxu0 0.0
        %234 = vmatpush1.msra.mxu0 0.0
        %235 = vmatprep.subr.mxu0 0.0
        %236 = vmatpush1.msra.mxu0 0.0
        %237 = vmatprep.subr.mxu0 0.0
        %238 = vmatpush1.msra.mxu0 0.0
        %239 = vmatprep.subr.mxu0 0.0
        %240 = vmatpush1.msra.mxu0 0.0
        %241 = vmatprep.subr.mxu0 0.0
        %242 = vmatpush1.msra.mxu0 0.0
        %243 = vmatprep.subr.mxu0 0.0
        %244 = vmatpush1.msra.mxu0 0.0
        %245 = vmatprep.subr.mxu0 0.0
        %246 = vmatpush1.msra.mxu0 0.0
        %247 = vmatprep.mubr.f32.mxu0 0.0
        %248 = vmatmul.mubr.f32.gmra.mrb[0].mxu0 %v181
        %v249 = vpop.f32.mrb[0].mxu0
        %v250 = vadd.f32 0.0, %v249
        %v251 = vpop.f32.mrb[0].mxu0
        %252 = vdwg.mxu0
        %v253 = vmul.f32 %v250, 0.25
        %255 = vrot.lane.b32.xlu0 %v253, 112
        %v256 = vpop.permute.xlu0 %255
        %vm257 = vcmask 130048
        %v258 = vsel %vm257, %v256, 0
        %v261 = vsel %vm257, %v250, 0
        %263 = vmatprep.subr.mxu0 0.0
        %264 = vmatpush1.xpose.msra.mxu0 %v261
        %265 = vmatprep.subr.mxu0 0.0
        %266 = vmatpush1.xpose.msra.mxu0 0.0
        %267 = vmatprep.subr.mxu0 0.0
        %268 = vmatpush1.xpose.msra.mxu0 0.0
        %269 = vmatprep.subr.mxu0 0.0
        %270 = vmatpush1.xpose.msra.mxu0 0.0
        %271 = vmatprep.subr.mxu0 0.0
        %272 = vmatpush1.xpose.msra.mxu0 0.0
        %273 = vmatprep.subr.mxu0 0.0
        %274 = vmatpush1.xpose.msra.mxu0 0.0
        %275 = vmatprep.subr.mxu0 0.0
        %276 = vmatpush1.xpose.msra.mxu0 0.0
        %277 = vmatprep.subr.mxu0 0.0
        %278 = vmatpush1.xpose.msra.mxu0 0.0
        %279 = vmatprep.subr.mxu0 0.0
        %280 = vmatpush1.xpose.msra.mxu0 0.0
        %281 = vmatprep.subr.mxu0 0.0
        %282 = vmatpush1.xpose.msra.mxu0 0.0
        %283 = vmatprep.subr.mxu0 0.0
        %284 = vmatpush1.xpose.msra.mxu0 0.0
        %285 = vmatprep.subr.mxu0 0.0
        %286 = vmatpush1.xpose.msra.mxu0 0.0
        %287 = vmatprep.subr.mxu0 0.0
        %288 = vmatpush1.xpose.msra.mxu0 0.0
        %289 = vmatprep.subr.mxu0 0.0
        %290 = vmatpush1.xpose.msra.mxu0 0.0
        %291 = vmatprep.subr.mxu0 0.0
        %292 = vmatpush1.xpose.msra.mxu0 0.0
        %293 = vmatprep.subr.mxu0 0.0
        %294 = vmatpush1.xpose.msra.mxu0 0.0
        %295 = vmatprep.subr.mxu0 0.0
        %296 = vmatpush1.xpose.msra.mxu0 0.0
        %297 = vmatprep.subr.mxu0 0.0
        %298 = vmatpush1.xpose.msra.mxu0 0.0
        %299 = vmatprep.subr.mxu0 0.0
        %300 = vmatpush1.xpose.msra.mxu0 0.0
        %301 = vmatprep.subr.mxu0 0.0
        %302 = vmatpush1.xpose.msra.mxu0 0.0
        %303 = vmatprep.subr.mxu0 0.0
        %304 = vmatpush1.xpose.msra.mxu0 0.0
        %305 = vmatprep.subr.mxu0 0.0
        %306 = vmatpush1.xpose.msra.mxu0 0.0
        %307 = vmatprep.subr.mxu0 0.0
        %308 = vmatpush1.xpose.msra.mxu0 0.0
        %309 = vmatprep.subr.mxu0 0.0
        %310 = vmatpush1.xpose.msra.mxu0 0.0
        %311 = vmatprep.subr.mxu0 0.0
        %312 = vmatpush1.xpose.msra.mxu0 0.0
        %313 = vmatprep.subr.mxu0 0.0
        %314 = vmatpush1.xpose.msra.mxu0 0.0
        %315 = vmatprep.subr.mxu0 0.0
        %316 = vmatpush1.xpose.msra.mxu0 0.0
        %317 = vmatprep.subr.mxu0 0.0
        %318 = vmatpush1.xpose.msra.mxu0 0.0
        %319 = vmatprep.subr.mxu0 0.0
        %320 = vmatpush1.xpose.msra.mxu0 0.0
        %321 = vmatprep.subr.mxu0 0.0
        %322 = vmatpush1.xpose.msra.mxu0 0.0
        %323 = vmatprep.subr.mxu0 0.0
        %324 = vmatpush1.xpose.msra.mxu0 0.0
        %325 = vmatprep.subr.mxu0 0.0
        %326 = vmatpush1.xpose.msra.mxu0 0.0
        %327 = vmatprep.mubr.f32.mxu0 0.0
        %328 = vmatmul.mubr.f32.gmra.mrb[0].mxu0 %v258
        %v329 = vpop.f32.mrb[0].mxu0
        %v330 = vadd.f32 0.0, %v329
        %v331 = vpop.f32.mrb[0].mxu0
        %332 = vdwg.mxu0
        %v333 = vlaneseq
        %v334 = vshrl.u32 %v333, 7
        %v335 = vlaneseq
        %v336 = vand.u32 %v335, 127
        %vm337 = vcmp.le.s32.totalorder %v336, %v334
        %v338 = vsel %vm337, %v330, -inf
        %vm339 = vcmask 64512
        %v340 = vsel %vm339, %v338, -inf
        %341 = vmax.xlane.f32.xlu0 %v340
        %v342 = vpop.xlane.xlu0 %341
        %v343 = vsub.f32 %v338, %v342
        %v344 = vmul.f32 %v343, 1.442695
        %v345 = vpow.pop %v344
        %v346 = vsel %vm339, %v345, 0.0
        %347 = vadd.xlane.f32.xlu0 %v346
        %v348 = vpop.xlane.xlu0 %347
        %v349 = vrcp.pop %v348
        %v350 = vmul.f32 %v348, %v349
        %v351 = vsub.f32 2.0, %v350
        %v352 = vmul.f32 %v349, %v351
        %v353 = vmul.f32 %v345, %v352
        %354 = vrot.lane.b32.xlu0 %v250, 96
        %v355 = vpop.permute.xlu0 %354
        %v358 = vsel %vm339, %v353, 0
        %360 = vmatprep.subr.mxu0 0.0
        %361 = vmatpush1.msra.mxu0 %v355
        %362 = vmatprep.subr.mxu0 0.0
        %363 = vmatpush1.msra.mxu0 0.0
        %364 = vmatprep.subr.mxu0 0.0
        %365 = vmatpush1.msra.mxu0 0.0
        %366 = vmatprep.subr.mxu0 0.0
        %367 = vmatpush1.msra.mxu0 0.0
        %368 = vmatprep.subr.mxu0 0.0
        %369 = vmatpush1.msra.mxu0 0.0
        %370 = vmatprep.subr.mxu0 0.0
        %371 = vmatpush1.msra.mxu0 0.0
        %372 = vmatprep.subr.mxu0 0.0
        %373 = vmatpush1.msra.mxu0 0.0
        %374 = vmatprep.subr.mxu0 0.0
        %375 = vmatpush1.msra.mxu0 0.0
        %376 = vmatprep.subr.mxu0 0.0
        %377 = vmatpush1.msra.mxu0 0.0
        %378 = vmatprep.subr.mxu0 0.0
        %379 = vmatpush1.msra.mxu0 0.0
        %380 = vmatprep.subr.mxu0 0.0
        %381 = vmatpush1.msra.mxu0 0.0
        %382 = vmatprep.subr.mxu0 0.0
        %383 = vmatpush1.msra.mxu0 0.0
        %384 = vmatprep.subr.mxu0 0.0
        %385 = vmatpush1.msra.mxu0 0.0
        %386 = vmatprep.subr.mxu0 0.0
        %387 = vmatpush1.msra.mxu0 0.0
        %388 = vmatprep.subr.mxu0 0.0
        %389 = vmatpush1.msra.mxu0 0.0
        %390 = vmatprep.subr.mxu0 0.0
        %391 = vmatpush1.msra.mxu0 0.0
        %392 = vmatprep.subr.mxu0 0.0
        %393 = vmatpush1.msra.mxu0 0.0
        %394 = vmatprep.subr.mxu0 0.0
        %395 = vmatpush1.msra.mxu0 0.0
        %396 = vmatprep.subr.mxu0 0.0
        %397 = vmatpush1.msra.mxu0 0.0
        %398 = vmatprep.subr.mxu0 0.0
        %399 = vmatpush1.msra.mxu0 0.0
        %400 = vmatprep.subr.mxu0 0.0
        %401 = vmatpush1.msra.mxu0 0.0
        %402 = vmatprep.subr.mxu0 0.0
        %403 = vmatpush1.msra.mxu0 0.0
        %404 = vmatprep.subr.mxu0 0.0
        %405 = vmatpush1.msra.mxu0 0.0
        %406 = vmatprep.subr.mxu0 0.0
        %407 = vmatpush1.msra.mxu0 0.0
        %408 = vmatprep.subr.mxu0 0.0
        %409 = vmatpush1.msra.mxu0 0.0
        %410 = vmatprep.subr.mxu0 0.0
        %411 = vmatpush1.msra.mxu0 0.0
        %412 = vmatprep.subr.mxu0 0.0
        %413 = vmatpush1.msra.mxu0 0.0
        %414 = vmatprep.subr.mxu0 0.0
        %415 = vmatpush1.msra.mxu0 0.0
        %416 = vmatprep.subr.mxu0 0.0
        %417 = vmatpush1.msra.mxu0 0.0
        %418 = vmatprep.subr.mxu0 0.0
        %419 = vmatpush1.msra.mxu0 0.0
        %420 = vmatprep.subr.mxu0 0.0
        %421 = vmatpush1.msra.mxu0 0.0
        %422 = vmatprep.subr.mxu0 0.0
        %423 = vmatpush1.msra.mxu0 0.0
        %424 = vmatprep.mubr.f32.mxu0 0.0
        %425 = vmatmul.mubr.f32.gmra.mrb[0].mxu0 %v358
        %v426 = vpop.f32.mrb[0].mxu0
        %v427 = vadd.f32 0.0, %v426
        %v428 = vpop.f32.mrb[0].mxu0
        %429 = vdwg.mxu0
        %v430 = vmul.f32 %v427, 10000.0
        %v431 = vround.ne.pseudo %v430
        %v432 = vrcp.pop 10000.0
        %v433 = vmul.f32 %v431, %v432
        %434 = vst.msk [vmem:[%s173] sm:$0xff] %vm257, %v433
        %s435 = sand.u32 %s75, 1
        %s436 = scalar_lea.sflag [#allocation4], %s435
        %s437 = sand.u32 %s75, 1
        %s438 = smul.addr %s437, 8
        %s439 = scalar_lea.vmem [#allocation7], %s438
        // Predicated region
        $region37: #{tpu_custom_call.1} parent=27 // pred_check
          %p440 = pneg %p85
        $region38: #{tpu_custom_call.1} parent=27 // pred_check_branch
          %442 = sbr.rel (%p440) target = $region40
        $region39: #{tpu_custom_call.1} parent=27 // pred_region
          %s444 = ssub.s32 128, 128
          %445 = vsyncadd %s436, %s444
          %s446 = smul.addr %s20, 128
          %s447 = scalar_lea.hbm %s2, %s446
          %s449 = sshll.u32 %s439, 4
          %s450 = int_to_ptr.vmem [resolvable:$true] %s449
          %452 = dma.vmem_to_hbm [thread:$0]  %s450, 128, %s447, %s436
        $region40: #{tpu_custom_call.1} parent=27 // pred_fallthru
          _
      $region28: #{tpu_custom_call.1} parent=5 // pred_fallthru
        _
      %p453 = scmp.le.s32.totalorder 2, %s15
      // Predicated region
      $region41: #{tpu_custom_call.1} parent=5 // pred_check
        %p454 = pneg %p453
      $region42: #{tpu_custom_call.1} parent=5 // pred_check_branch
        %456 = sbr.rel (%p454) target = $region44
      $region43: #{tpu_custom_call.1} parent=5 // pred_region
        %s457 = ssub.s32 %s15, 2
        // Predicated region
        $region45: #{tpu_custom_call.1} parent=43 // pred_check
          %p458 = pneg %p91
        $region46: #{tpu_custom_call.1} parent=43 // pred_check_branch
          %460 = sbr.rel (%p458) target = $region48
        $region47: #{tpu_custom_call.1} parent=43 // pred_region
          %s461 = sand.u32 %s76, 1
          %s462 = scalar_lea.sflag [#allocation4], %s461
          %s463 = sand.u32 %s76, 1
          %s464 = smul.addr %s463, 8
          %s465 = scalar_lea.vmem [#allocation7], %s464
          %466 = dma.done %s462, 128
        $region48: #{tpu_custom_call.1} parent=43 // pred_fallthru
          _
      $region44: #{tpu_custom_call.1} parent=5 // pred_fallthru
        _
    $region6: #{tpu_custom_call.1} parent=1 // loop_footer
      %s19 = sadd.s32 1, %s15
    $region7: #{tpu_custom_call.1} parent=1 // loop_footer_branch
      %14 = sbr.rel target = $region3
    $region8: #{tpu_custom_call.1} parent=1 // loop_exit
      _
    %467 = vsyncpa [#allocation3], 1
    %s468 = scalar_lea.sflag [#allocation3], 1
    %469 = vsyncpa %s468, 1
    %470 = vsyncpa [#allocation6], 1
    %471 = vsyncpa [#allocation4], 1
    %s472 = scalar_lea.sflag [#allocation4], 1
    %473 = vsyncpa %s472, 1

</llo_original>
